<compile_context>
chip_gen: v7x
topology: tpu7x:2x2x1
jax: 0.10.0
libtpu: 0.0.40
codegen_flags: <defaults>
</compile_context>

<pallas_src>
import jax
import jax.numpy as jnp
from jax import lax
from jax.experimental import pallas as pl
from jax.experimental.pallas import tpu as pltpu


# ----------------------------- in-kernel helpers -----------------------------

def _edge_masks(Hp, Wp, M):
    """Hoisted 3x3 SAME-conv edge masks on the flat M = n*Hp*Wp + h*Wp + w axis.
    Computed once per kernel invocation; shared by both convs.  Returns a dict
    {(dh, dw): (1, M) bool mask or None}."""
    pos = lax.broadcasted_iota(jnp.int32, (1, M), 1)
    w = pos % Wp
    r = pos % (Hp * Wp)
    w_lo = w >= 1                 # may read w-1
    w_hi = w <= Wp - 2            # may read w+1
    h_lo = r >= Wp                # may read h-1
    h_hi = r < (Hp - 1) * Wp      # may read h+1
    hms = {-1: h_lo, 0: None, 1: h_hi}
    wms = {-1: w_lo, 0: None, 1: w_hi}
    masks = {}
    for dh in (-1, 0, 1):
        for dw in (-1, 0, 1):
            hm, wm = hms[dh], wms[dw]
            if hm is None and wm is None:
                masks[(dh, dw)] = None
            elif hm is None:
                masks[(dh, dw)] = wm
            elif wm is None:
                masks[(dh, dw)] = hm
            else:
                masks[(dh, dw)] = jnp.logical_and(hm, wm)
    return masks


def _im2col_3x3(t, Wp, masks):
    """(C, M) -> (9*C, M) patch matrix for a 3x3 SAME conv.
    Each tap = one lane-axis roll (XLU) + one select with a precomputed edge mask.
    Tap order matches a (Cout, 9, C) -> (Cout, 9*C) weight reshape."""
    C, M = t.shape
    taps = []
    for dh in (-1, 0, 1):
        for dw in (-1, 0, 1):
            s = dh * Wp + dw
            tap = t if s == 0 else pltpu.roll(t, shift=(-s) % M, axis=1)
            mask = masks[(dh, dw)]
            if mask is not None:
                tap = jnp.where(mask, tap, 0.0)
            taps.append(tap)
    return jnp.concatenate(taps, axis=0)          # (9*C, M)


def _make_down_kernel(Hp, Wp, M, Cin, Cout, identity_skip):
    def kernel(x_ref, w1_ref, w2_ref, *rest):
        if identity_skip:
            b_ref, o_ref = rest
            wskip_ref = None
        else:
            wskip_ref, b_ref, o_ref = rest

        # ---- 2x2 max pool: the 4 pooling phases are the leading axis of the block.
        a = jnp.maximum(x_ref[0], x_ref[1])
        b = jnp.maximum(x_ref[2], x_ref[3])
        p = jnp.maximum(a, b).astype(jnp.float32)          # (Cin, M), M on lanes

        masks = _edge_masks(Hp, Wp, M)                     # hoisted once, reused twice
        bv = b_ref[...]                                    # (Cout, 2 or 3)

        # ---- conv1 (3x3, BN1 scale folded into weights) + bias + ReLU
        y = jnp.dot(w1_ref[...], _im2col_3x3(p, Wp, masks),
                    preferred_element_type=jnp.float32)    # (Cout, M)
        y = jnp.maximum(y + bv[:, 0:1], 0.0)

        # ---- conv2 (3x3, BN2 scale folded) + bias
        y = jnp.dot(w2_ref[...], _im2col_3x3(y, Wp, masks),
                    preferred_element_type=jnp.float32)    # (Cout, M)
        y = y + bv[:, 1:2]

        # ---- skip: identity when Cin == Cout, else 1x1 conv
        if identity_skip:
            skip = p
        else:
            skip = jnp.dot(wskip_ref[...], p,
                           preferred_element_type=jnp.float32) + bv[:, 2:3]

        # Lane-dense store, no transpose: (Cout, M) with M a multiple of 128.
        o_ref[...] = jnp.maximum(y + skip, 0.0).astype(o_ref.dtype)

    return kernel


# ------------------------------ step-size heuristic ---------------------------

def _step_vmem_bytes(Nb, Hp, Wp, Cin, Cout):
    """Rough f32 VMEM bytes for one grid step (double-buffered blocks + live temps)."""
    M = Nb * Hp * Wp
    rows = lambda c: -(-c // 8) * 8                        # sublane padding
    words = (2 * 4 * rows(Cin)                             # input block, double-buffered
             + 9 * rows(Cin) + 9 * rows(Cout)              # im2col patch matrices
             + rows(Cin) + 3 * rows(Cout)                  # p, y, skip, out
             + 2 * rows(Cout))                             # output block, double-buffered
    return words * M * 4


def _pick_images_per_step(N, Hp, Wp, Cin, Cout, budget_bytes):
    hw = Hp * Wp
    divisors = [d for d in range(1, N + 1) if N % d == 0]
    # full-lane steps (M multiple of 128); fall back to a single step (block == array)
    lane_ok = [d for d in divisors if (d * hw) % 128 == 0] or [N]
    fit = [d for d in lane_ok
           if _step_vmem_bytes(d, Hp, Wp, Cin, Cout) <= budget_bytes] or [min(lane_ok)]
    # smallest step with M >= 512 (amortizes per-step overhead, keeps >=2 steps when
    # the batch allows -> both v7x TensorCores busy); else the largest fitting step.
    good = [d for d in fit if d * hw >= 512]
    return min(good) if good else max(fit)


# --------------------------------- wrapper -----------------------------------

def down_pallas(x_nchw, params, *, images_per_step=None):
    """x_nchw: (N, Cin, H, W) -> (N, Cout, H//2, W//2), matching PyTorch Down (eval)."""
    w1, w2, wskip, s1, b1, s2, b2, bskip = params
    N, Cin, H, W = x_nchw.shape
    assert H % 2 == 0 and W % 2 == 0, "MaxPool2d(2) wrapper assumes even H, W"
    Hp, Wp = H // 2, W // 2
    Cout = w1.shape[-1]
    identity_skip = wskip is None

    # Fold BN scales into conv weights; pre-transpose so matmuls are (Cout,K)@(K,M).
    w1f = jnp.transpose(w1 * s1.reshape(1, 1, Cout), (2, 0, 1)) \
             .reshape(Cout, 9 * Cin).astype(jnp.float32)
    w2f = jnp.transpose(w2 * s2.reshape(1, 1, Cout), (2, 0, 1)) \
             .reshape(Cout, 9 * Cout).astype(jnp.float32)
    biases = [b1, b2] if identity_skip else [b1, b2, bskip]
    bpack = jnp.concatenate(biases, axis=0).T.astype(jnp.float32)    # (Cout, 2|3)

    # Grid step size: whole pooled images, M per step a multiple of 128, VMEM-budgeted.
    vmem_budget = 24 * 1024 * 1024                                   # conservative for v7x
    if images_per_step is None:
        images_per_step = _pick_images_per_step(N, Hp, Wp, Cin, Cout, vmem_budget)
    Nb = images_per_step
    assert N % Nb == 0
    grid_n = N // Nb
    M_step = Nb * Hp * Wp
    M_total = N * Hp * Wp

    # One HBM-side transpose exposing the 4 pooling phases with M lane-dense:
    # (N, Cin, H, W) -> (phase=4, Cin, N*Hp*Wp).
    x = x_nchw.reshape(N, Cin, Hp, 2, Wp, 2).astype(jnp.float32)
    x = jnp.transpose(x, (3, 5, 1, 0, 2, 4)).reshape(4, Cin, M_total)

    operands = [x, w1f, w2f]
    in_specs = [pl.BlockSpec((4, Cin, M_step), lambda i: (0, 0, i)),
                pl.BlockSpec(w1f.shape, lambda i: (0, 0)),
                pl.BlockSpec(w2f.shape, lambda i: (0, 0))]
    if not identity_skip:
        wskipT = jnp.transpose(wskip).astype(jnp.float32)            # (Cout, Cin)
        operands.append(wskipT)
        in_specs.append(pl.BlockSpec(wskipT.shape, lambda i: (0, 0)))
    operands.append(bpack)
    in_specs.append(pl.BlockSpec(bpack.shape, lambda i: (0, 0)))

    vmem_limit = int(min(48 * 1024 * 1024,
                         max(32 * 1024 * 1024,
                             2 * _step_vmem_bytes(Nb, Hp, Wp, Cin, Cout))))

    out = pl.pallas_call(
        _make_down_kernel(Hp, Wp, M_step, Cin, Cout, identity_skip),
        out_shape=jax.ShapeDtypeStruct((Cout, M_total), jnp.float32),
        grid=(grid_n,),
        in_specs=in_specs,
        out_specs=pl.BlockSpec((Cout, M_step), lambda i: (0, i)),
        compiler_params=pltpu.CompilerParams(
            dimension_semantics=("parallel",),
            vmem_limit_bytes=vmem_limit),
    )(*operands)

    # (Cout, N*Hp*Wp) -> (N, Cout, Hp, Wp)  (tiny XLA-side reshape/transpose)
    return jnp.transpose(out.reshape(Cout, N, Hp, Wp), (1, 0, 2, 3))


# ------------------------- params + pure-JAX reference ------------------------

def init_params(key, Cin, Cout, eps=1e-5):
    """Deterministic synthetic parameters; BN (eval mode) folded into scale/bias."""
    ks = jax.random.split(key, 16)

    def bn(kg, kb, km, kv):
        g = 1.0 + 0.1 * jax.random.normal(kg, (Cout,), jnp.float32)
        be = 0.1 * jax.random.normal(kb, (Cout,), jnp.float32)
        mu = 0.1 * jax.random.normal(km, (Cout,), jnp.float32)
        var = 1.0 + 0.5 * jax.random.uniform(kv, (Cout,), jnp.float32)
        return g, be, mu, var

    w1 = 0.1 * jax.random.normal(ks[0], (3, 3, Cin, Cout), jnp.float32)    # HWIO
    bc1 = 0.1 * jax.random.normal(ks[1], (Cout,), jnp.float32)
    g1, be1, m1, v1 = bn(ks[2], ks[3], ks[4], ks[5])
    w2 = 0.1 * jax.random.normal(ks[6], (3, 3, Cout, Cout), jnp.float32)
    bc2 = 0.1 * jax.random.normal(ks[7], (Cout,), jnp.float32)
    g2, be2, m2, v2 = bn(ks[8], ks[9], ks[10], ks[11])

    s1 = g1 / jnp.sqrt(v1 + eps)
    b1 = (bc1 - m1) * s1 + be1
    s2 = g2 / jnp.sqrt(v2 + eps)
    b2 = (bc2 - m2) * s2 + be2

    if Cin == Cout:                                    # nn.Identity skip
        wskip, bskip = None, None
    else:                                              # 1x1 conv skip
        wskip = 0.1 * jax.random.normal(ks[12], (Cin, Cout), jnp.float32)
        bskip = (0.1 * jax.random.normal(ks[13], (Cout,), jnp.float32)).reshape(1, Cout)

    return (w1.reshape(9, Cin, Cout), w2.reshape(9, Cout, Cout), wskip,
            s1.reshape(1, Cout), b1.reshape(1, Cout),
            s2.reshape(1, Cout), b2.reshape(1, Cout),
            bskip)


def down_ref(x_nchw, params):
    """Pure-JAX reference (same math as the PyTorch module in eval mode)."""
    w1, w2, wskip, s1, b1, s2, b2, bskip = params
    Cin = x_nchw.shape[1]
    Cout = w1.shape[-1]
    w1 = w1.reshape(3, 3, Cin, Cout)
    w2 = w2.reshape(3, 3, Cout, Cout)

    x = jnp.transpose(x_nchw, (0, 2, 3, 1)).astype(jnp.float32)
    p = lax.reduce_window(x, -jnp.inf, lax.max, (1, 2, 2, 1), (1, 2, 2, 1), 'VALID')
    dn = ('NHWC', 'HWIO', 'NHWC')
    y = lax.conv_general_dilated(p, w1, (1, 1), 'SAME', dimension_numbers=dn)
    y = jax.nn.relu(y * s1[0] + b1[0])
    y = lax.conv_general_dilated(y, w2, (1, 1), 'SAME', dimension_numbers=dn)
    y = y * s2[0] + b2[0]
    skip = p if wskip is None else jnp.einsum('nhwc,cd->nhwd', p, wskip) + bskip[0]
    out = jax.nn.relu(y + skip)
    return jnp.transpose(out, (0, 3, 1, 2))


if __name__ == "__main__":
    key = jax.random.PRNGKey(0)
    kx, kp, kx2, kp2 = jax.random.split(key, 4)

    # Case 1: ch_in != ch_out (1x1 conv skip).
    N, Cin, H, W, Cout = 2, 4, 16, 16, 8
    x = jax.random.normal(kx, (N, Cin, H, W), jnp.float32)
    params = init_params(kp, Cin, Cout)
    out = jax.block_until_ready(down_pallas(x, params))
    ref = down_ref(x, params)
    assert out.shape == (N, Cout, H // 2, W // 2), out.shape
    assert jnp.allclose(out, ref, rtol=1e-4, atol=1e-4), \
        float(jnp.max(jnp.abs(out - ref)))

    # Case 2: ch_in == ch_out (identity skip, 1x1 conv statically elided).
    x2 = jax.random.normal(kx2, (N, Cout, H, W), jnp.float32)
    params2 = init_params(kp2, Cout, Cout)
    out2 = jax.block_until_ready(down_pallas(x2, params2))
    ref2 = down_ref(x2, params2)
    assert jnp.allclose(out2, ref2, rtol=1e-4, atol=1e-4), \
        float(jnp.max(jnp.abs(out2 - ref2)))

    print("KERNEL_OK")
</pallas_src>

<mosaic_0001>
module attributes {stable_mosaic.version = 11 : i64} {
  func.func @kernel(%arg0: i32, %arg1: memref<4x4x128xf32, #tpu.memory_space<vmem>>, %arg2: memref<8x36xf32, #tpu.memory_space<vmem>>, %arg3: memref<8x72xf32, #tpu.memory_space<vmem>>, %arg4: memref<8x4xf32, #tpu.memory_space<vmem>>, %arg5: memref<8x3xf32, #tpu.memory_space<vmem>>, %arg6: memref<8x128xf32, #tpu.memory_space<vmem>>) attributes {dimension_semantics = [#tpu.dimension_semantics<parallel>], iteration_bounds = array<i64: 1>, scalar_prefetch = 0 : i64, scratch_operands = 0 : i64, tpu.core_type = #tpu.core_type<tc>, window_params = [{transform_indices = @transform_0, window_bounds = array<i64: 4, 4, 128>}, {pipeline_mode = #tpu.pipeline_mode<synchronous>, transform_indices = @transform_1, window_bounds = array<i64: 8, 36>}, {pipeline_mode = #tpu.pipeline_mode<synchronous>, transform_indices = @transform_2, window_bounds = array<i64: 8, 72>}, {pipeline_mode = #tpu.pipeline_mode<synchronous>, transform_indices = @transform_3, window_bounds = array<i64: 8, 4>}, {pipeline_mode = #tpu.pipeline_mode<synchronous>, transform_indices = @transform_4, window_bounds = array<i64: 8, 3>}, {transform_indices = @transform_5, window_bounds = array<i64: 8, 128>}]} {
    %c0 = arith.constant 0 : index
    %c0_0 = arith.constant 0 : index
    %c0_1 = arith.constant 0 : index
    %0 = vector.load %arg1[%c0, %c0_0, %c0_1] : memref<4x4x128xf32, #tpu.memory_space<vmem>>, vector<1x4x128xf32>
    %1 = vector.shape_cast %0 : vector<1x4x128xf32> to vector<4x128xf32>
    %c1 = arith.constant 1 : index
    %c0_2 = arith.constant 0 : index
    %c0_3 = arith.constant 0 : index
    %2 = vector.load %arg1[%c1, %c0_2, %c0_3] : memref<4x4x128xf32, #tpu.memory_space<vmem>>, vector<1x4x128xf32>
    %3 = vector.shape_cast %2 : vector<1x4x128xf32> to vector<4x128xf32>
    %4 = arith.maximumf %1, %3 : vector<4x128xf32>
    %c2 = arith.constant 2 : index
    %c0_4 = arith.constant 0 : index
    %c0_5 = arith.constant 0 : index
    %5 = vector.load %arg1[%c2, %c0_4, %c0_5] : memref<4x4x128xf32, #tpu.memory_space<vmem>>, vector<1x4x128xf32>
    %6 = vector.shape_cast %5 : vector<1x4x128xf32> to vector<4x128xf32>
    %c3 = arith.constant 3 : index
    %c0_6 = arith.constant 0 : index
    %c0_7 = arith.constant 0 : index
    %7 = vector.load %arg1[%c3, %c0_6, %c0_7] : memref<4x4x128xf32, #tpu.memory_space<vmem>>, vector<1x4x128xf32>
    %8 = vector.shape_cast %7 : vector<1x4x128xf32> to vector<4x128xf32>
    %9 = arith.maximumf %6, %8 : vector<4x128xf32>
    %10 = arith.maximumf %4, %9 : vector<4x128xf32>
    %11 = tpu.iota {dimensions = array<i32: 1>} : vector<1x128xi32>
    %c8_i32 = arith.constant 8 : i32
    %c0_i32 = arith.constant 0 : i32
    %12 = arith.cmpi eq, %c8_i32, %c0_i32 : i32
    %c1_i32 = arith.constant 1 : i32
    %13 = arith.select %12, %c1_i32, %c8_i32 : i32
    %14 = vector.broadcast %13 : i32 to vector<1x128xi32>
    %15 = arith.remsi %11, %14 : vector<1x128xi32>
    %c0_i32_8 = arith.constant 0 : i32
    %16 = vector.broadcast %c0_i32_8 : i32 to vector<1x128xi32>
    %17 = arith.cmpi ne, %15, %16 : vector<1x128xi32>
    %c0_i32_9 = arith.constant 0 : i32
    %18 = vector.broadcast %c0_i32_9 : i32 to vector<1x128xi32>
    %19 = arith.cmpi slt, %15, %18 : vector<1x128xi32>
    %c0_i32_10 = arith.constant 0 : i32
    %20 = arith.cmpi slt, %13, %c0_i32_10 : i32
    %21 = vector.broadcast %20 : i1 to vector<1x128xi1>
    %22 = vector.broadcast %21 : vector<1x128xi1> to vector<1x128xi1>
    %23 = arith.xori %19, %22 : vector<1x128xi1>
    %24 = arith.andi %23, %17 : vector<1x128xi1>
    %25 = vector.broadcast %13 : i32 to vector<1x128xi32>
    %26 = arith.addi %15, %25 : vector<1x128xi32>
    %27 = arith.select %24, %26, %15 : vector<1x128xi1>, vector<1x128xi32>
    %c64_i32 = arith.constant 64 : i32
    %c0_i32_11 = arith.constant 0 : i32
    %28 = arith.cmpi eq, %c64_i32, %c0_i32_11 : i32
    %c1_i32_12 = arith.constant 1 : i32
    %29 = arith.select %28, %c1_i32_12, %c64_i32 : i32
    %30 = vector.broadcast %29 : i32 to vector<1x128xi32>
    %31 = arith.remsi %11, %30 : vector<1x128xi32>
    %c0_i32_13 = arith.constant 0 : i32
    %32 = vector.broadcast %c0_i32_13 : i32 to vector<1x128xi32>
    %33 = arith.cmpi ne, %31, %32 : vector<1x128xi32>
    %c0_i32_14 = arith.constant 0 : i32
    %34 = vector.broadcast %c0_i32_14 : i32 to vector<1x128xi32>
    %35 = arith.cmpi slt, %31, %34 : vector<1x128xi32>
    %c0_i32_15 = arith.constant 0 : i32
    %36 = arith.cmpi slt, %29, %c0_i32_15 : i32
    %37 = vector.broadcast %36 : i1 to vector<1x128xi1>
    %38 = vector.broadcast %37 : vector<1x128xi1> to vector<1x128xi1>
    %39 = arith.xori %35, %38 : vector<1x128xi1>
    %40 = arith.andi %39, %33 : vector<1x128xi1>
    %41 = vector.broadcast %29 : i32 to vector<1x128xi32>
    %42 = arith.addi %31, %41 : vector<1x128xi32>
    %43 = arith.select %40, %42, %31 : vector<1x128xi1>, vector<1x128xi32>
    %c1_i32_16 = arith.constant 1 : i32
    %44 = vector.broadcast %c1_i32_16 : i32 to vector<1x128xi32>
    %45 = arith.cmpi sge, %27, %44 : vector<1x128xi32>
    %c6_i32 = arith.constant 6 : i32
    %46 = vector.broadcast %c6_i32 : i32 to vector<1x128xi32>
    %47 = arith.cmpi sle, %27, %46 : vector<1x128xi32>
    %c8_i32_17 = arith.constant 8 : i32
    %48 = vector.broadcast %c8_i32_17 : i32 to vector<1x128xi32>
    %49 = arith.cmpi sge, %43, %48 : vector<1x128xi32>
    %c56_i32 = arith.constant 56 : i32
    %50 = vector.broadcast %c56_i32 : i32 to vector<1x128xi32>
    %51 = arith.cmpi slt, %43, %50 : vector<1x128xi32>
    %52 = arith.andi %49, %45 : vector<1x128xi1>
    %53 = arith.andi %49, %47 : vector<1x128xi1>
    %54 = arith.andi %51, %45 : vector<1x128xi1>
    %55 = arith.andi %51, %47 : vector<1x128xi1>
    %c0_18 = arith.constant 0 : index
    %c0_19 = arith.constant 0 : index
    %56 = vector.load %arg5[%c0_18, %c0_19] : memref<8x3xf32, #tpu.memory_space<vmem>>, vector<8x3xf32>
    %c0_20 = arith.constant 0 : index
    %c0_21 = arith.constant 0 : index
    %57 = vector.load %arg2[%c0_20, %c0_21] : memref<8x36xf32, #tpu.memory_space<vmem>>, vector<8x36xf32>
    %c9_i32 = arith.constant 9 : i32
    %58 = tpu.dynamic_rotate %10 by %c9_i32 dim 1 : vector<4x128xf32>, i32 -> vector<4x128xf32>
    %cst = arith.constant 0.000000e+00 : f32
    %59 = vector.shape_cast %52 : vector<1x128xi1> to vector<1x128xi1>
    %60 = vector.broadcast %59 : vector<1x128xi1> to vector<4x128xi1>
    %61 = vector.broadcast %cst : f32 to vector<4x128xf32>
    %62 = arith.select %60, %58, %61 : vector<4x128xi1>, vector<4x128xf32>
    %c8_i32_22 = arith.constant 8 : i32
    %63 = tpu.dynamic_rotate %10 by %c8_i32_22 dim 1 : vector<4x128xf32>, i32 -> vector<4x128xf32>
    %cst_23 = arith.constant 0.000000e+00 : f32
    %64 = vector.shape_cast %49 : vector<1x128xi1> to vector<1x128xi1>
    %65 = vector.broadcast %64 : vector<1x128xi1> to vector<4x128xi1>
    %66 = vector.broadcast %cst_23 : f32 to vector<4x128xf32>
    %67 = arith.select %65, %63, %66 : vector<4x128xi1>, vector<4x128xf32>
    %c7_i32 = arith.constant 7 : i32
    %68 = tpu.dynamic_rotate %10 by %c7_i32 dim 1 : vector<4x128xf32>, i32 -> vector<4x128xf32>
    %cst_24 = arith.constant 0.000000e+00 : f32
    %69 = vector.shape_cast %53 : vector<1x128xi1> to vector<1x128xi1>
    %70 = vector.broadcast %69 : vector<1x128xi1> to vector<4x128xi1>
    %71 = vector.broadcast %cst_24 : f32 to vector<4x128xf32>
    %72 = arith.select %70, %68, %71 : vector<4x128xi1>, vector<4x128xf32>
    %c1_i32_25 = arith.constant 1 : i32
    %73 = tpu.dynamic_rotate %10 by %c1_i32_25 dim 1 : vector<4x128xf32>, i32 -> vector<4x128xf32>
    %cst_26 = arith.constant 0.000000e+00 : f32
    %74 = vector.shape_cast %45 : vector<1x128xi1> to vector<1x128xi1>
    %75 = vector.broadcast %74 : vector<1x128xi1> to vector<4x128xi1>
    %76 = vector.broadcast %cst_26 : f32 to vector<4x128xf32>
    %77 = arith.select %75, %73, %76 : vector<4x128xi1>, vector<4x128xf32>
    %c127_i32 = arith.constant 127 : i32
    %78 = tpu.dynamic_rotate %10 by %c127_i32 dim 1 : vector<4x128xf32>, i32 -> vector<4x128xf32>
    %cst_27 = arith.constant 0.000000e+00 : f32
    %79 = vector.shape_cast %47 : vector<1x128xi1> to vector<1x128xi1>
    %80 = vector.broadcast %79 : vector<1x128xi1> to vector<4x128xi1>
    %81 = vector.broadcast %cst_27 : f32 to vector<4x128xf32>
    %82 = arith.select %80, %78, %81 : vector<4x128xi1>, vector<4x128xf32>
    %c121_i32 = arith.constant 121 : i32
    %83 = tpu.dynamic_rotate %10 by %c121_i32 dim 1 : vector<4x128xf32>, i32 -> vector<4x128xf32>
    %cst_28 = arith.constant 0.000000e+00 : f32
    %84 = vector.shape_cast %54 : vector<1x128xi1> to vector<1x128xi1>
    %85 = vector.broadcast %84 : vector<1x128xi1> to vector<4x128xi1>
    %86 = vector.broadcast %cst_28 : f32 to vector<4x128xf32>
    %87 = arith.select %85, %83, %86 : vector<4x128xi1>, vector<4x128xf32>
    %c120_i32 = arith.constant 120 : i32
    %88 = tpu.dynamic_rotate %10 by %c120_i32 dim 1 : vector<4x128xf32>, i32 -> vector<4x128xf32>
    %cst_29 = arith.constant 0.000000e+00 : f32
    %89 = vector.shape_cast %51 : vector<1x128xi1> to vector<1x128xi1>
    %90 = vector.broadcast %89 : vector<1x128xi1> to vector<4x128xi1>
    %91 = vector.broadcast %cst_29 : f32 to vector<4x128xf32>
    %92 = arith.select %90, %88, %91 : vector<4x128xi1>, vector<4x128xf32>
    %c119_i32 = arith.constant 119 : i32
    %93 = tpu.dynamic_rotate %10 by %c119_i32 dim 1 : vector<4x128xf32>, i32 -> vector<4x128xf32>
    %cst_30 = arith.constant 0.000000e+00 : f32
    %94 = vector.shape_cast %55 : vector<1x128xi1> to vector<1x128xi1>
    %95 = vector.broadcast %94 : vector<1x128xi1> to vector<4x128xi1>
    %96 = vector.broadcast %cst_30 : f32 to vector<4x128xf32>
    %97 = arith.select %95, %93, %96 : vector<4x128xi1>, vector<4x128xf32>
    %98 = tpu.concatenate %62, %67, %72, %77, %10, %82, %87, %92, %97 in 0 : vector<4x128xf32>, vector<4x128xf32>, vector<4x128xf32>, vector<4x128xf32>, vector<4x128xf32>, vector<4x128xf32>, vector<4x128xf32>, vector<4x128xf32>, vector<4x128xf32> -> vector<36x128xf32>
    %cst_31 = arith.constant dense<0.000000e+00> : vector<8x128xf32>
    %99 = tpu.matmul %57, %98, %cst_31 {dimension_numbers = #tpu.dot_dimension_numbers<[1], [0], [0], [1], [0, 0, 1, 1], [], []>} : vector<8x36xf32>, vector<36x128xf32>, vector<8x128xf32> -> vector<8x128xf32>
    %100 = vector.extract_strided_slice %56 {offsets = [0, 0], sizes = [8, 1], strides = [1, 1]} : vector<8x3xf32> to vector<8x1xf32>
    %101 = vector.broadcast %100 : vector<8x1xf32> to vector<8x128xf32>
    %102 = arith.addf %99, %101 : vector<8x128xf32>
    %cst_32 = arith.constant 0.000000e+00 : f32
    %103 = vector.broadcast %cst_32 : f32 to vector<8x128xf32>
    %104 = arith.maximumf %102, %103 : vector<8x128xf32>
    %c0_33 = arith.constant 0 : index
    %c0_34 = arith.constant 0 : index
    %105 = vector.load %arg3[%c0_33, %c0_34] : memref<8x72xf32, #tpu.memory_space<vmem>>, vector<8x72xf32>
    %c9_i32_35 = arith.constant 9 : i32
    %106 = tpu.dynamic_rotate %104 by %c9_i32_35 dim 1 : vector<8x128xf32>, i32 -> vector<8x128xf32>
    %cst_36 = arith.constant 0.000000e+00 : f32
    %107 = vector.shape_cast %52 : vector<1x128xi1> to vector<1x128xi1>
    %108 = vector.broadcast %107 : vector<1x128xi1> to vector<8x128xi1>
    %109 = vector.broadcast %cst_36 : f32 to vector<8x128xf32>
    %110 = arith.select %108, %106, %109 : vector<8x128xi1>, vector<8x128xf32>
    %c8_i32_37 = arith.constant 8 : i32
    %111 = tpu.dynamic_rotate %104 by %c8_i32_37 dim 1 : vector<8x128xf32>, i32 -> vector<8x128xf32>
    %cst_38 = arith.constant 0.000000e+00 : f32
    %112 = vector.shape_cast %49 : vector<1x128xi1> to vector<1x128xi1>
    %113 = vector.broadcast %112 : vector<1x128xi1> to vector<8x128xi1>
    %114 = vector.broadcast %cst_38 : f32 to vector<8x128xf32>
    %115 = arith.select %113, %111, %114 : vector<8x128xi1>, vector<8x128xf32>
    %c7_i32_39 = arith.constant 7 : i32
    %116 = tpu.dynamic_rotate %104 by %c7_i32_39 dim 1 : vector<8x128xf32>, i32 -> vector<8x128xf32>
    %cst_40 = arith.constant 0.000000e+00 : f32
    %117 = vector.shape_cast %53 : vector<1x128xi1> to vector<1x128xi1>
    %118 = vector.broadcast %117 : vector<1x128xi1> to vector<8x128xi1>
    %119 = vector.broadcast %cst_40 : f32 to vector<8x128xf32>
    %120 = arith.select %118, %116, %119 : vector<8x128xi1>, vector<8x128xf32>
    %c1_i32_41 = arith.constant 1 : i32
    %121 = tpu.dynamic_rotate %104 by %c1_i32_41 dim 1 : vector<8x128xf32>, i32 -> vector<8x128xf32>
    %cst_42 = arith.constant 0.000000e+00 : f32
    %122 = vector.shape_cast %45 : vector<1x128xi1> to vector<1x128xi1>
    %123 = vector.broadcast %122 : vector<1x128xi1> to vector<8x128xi1>
    %124 = vector.broadcast %cst_42 : f32 to vector<8x128xf32>
    %125 = arith.select %123, %121, %124 : vector<8x128xi1>, vector<8x128xf32>
    %c127_i32_43 = arith.constant 127 : i32
    %126 = tpu.dynamic_rotate %104 by %c127_i32_43 dim 1 : vector<8x128xf32>, i32 -> vector<8x128xf32>
    %cst_44 = arith.constant 0.000000e+00 : f32
    %127 = vector.shape_cast %47 : vector<1x128xi1> to vector<1x128xi1>
    %128 = vector.broadcast %127 : vector<1x128xi1> to vector<8x128xi1>
    %129 = vector.broadcast %cst_44 : f32 to vector<8x128xf32>
    %130 = arith.select %128, %126, %129 : vector<8x128xi1>, vector<8x128xf32>
    %c121_i32_45 = arith.constant 121 : i32
    %131 = tpu.dynamic_rotate %104 by %c121_i32_45 dim 1 : vector<8x128xf32>, i32 -> vector<8x128xf32>
    %cst_46 = arith.constant 0.000000e+00 : f32
    %132 = vector.shape_cast %54 : vector<1x128xi1> to vector<1x128xi1>
    %133 = vector.broadcast %132 : vector<1x128xi1> to vector<8x128xi1>
    %134 = vector.broadcast %cst_46 : f32 to vector<8x128xf32>
    %135 = arith.select %133, %131, %134 : vector<8x128xi1>, vector<8x128xf32>
    %c120_i32_47 = arith.constant 120 : i32
    %136 = tpu.dynamic_rotate %104 by %c120_i32_47 dim 1 : vector<8x128xf32>, i32 -> vector<8x128xf32>
    %cst_48 = arith.constant 0.000000e+00 : f32
    %137 = vector.shape_cast %51 : vector<1x128xi1> to vector<1x128xi1>
    %138 = vector.broadcast %137 : vector<1x128xi1> to vector<8x128xi1>
    %139 = vector.broadcast %cst_48 : f32 to vector<8x128xf32>
    %140 = arith.select %138, %136, %139 : vector<8x128xi1>, vector<8x128xf32>
    %c119_i32_49 = arith.constant 119 : i32
    %141 = tpu.dynamic_rotate %104 by %c119_i32_49 dim 1 : vector<8x128xf32>, i32 -> vector<8x128xf32>
    %cst_50 = arith.constant 0.000000e+00 : f32
    %142 = vector.shape_cast %55 : vector<1x128xi1> to vector<1x128xi1>
    %143 = vector.broadcast %142 : vector<1x128xi1> to vector<8x128xi1>
    %144 = vector.broadcast %cst_50 : f32 to vector<8x128xf32>
    %145 = arith.select %143, %141, %144 : vector<8x128xi1>, vector<8x128xf32>
    %146 = tpu.concatenate %110, %115, %120, %125, %104, %130, %135, %140, %145 in 0 : vector<8x128xf32>, vector<8x128xf32>, vector<8x128xf32>, vector<8x128xf32>, vector<8x128xf32>, vector<8x128xf32>, vector<8x128xf32>, vector<8x128xf32>, vector<8x128xf32> -> vector<72x128xf32>
    %cst_51 = arith.constant dense<0.000000e+00> : vector<8x128xf32>
    %147 = tpu.matmul %105, %146, %cst_51 {dimension_numbers = #tpu.dot_dimension_numbers<[1], [0], [0], [1], [0, 0, 1, 1], [], []>} : vector<8x72xf32>, vector<72x128xf32>, vector<8x128xf32> -> vector<8x128xf32>
    %148 = vector.extract_strided_slice %56 {offsets = [0, 1], sizes = [8, 1], strides = [1, 1]} : vector<8x3xf32> to vector<8x1xf32>
    %149 = vector.broadcast %148 : vector<8x1xf32> to vector<8x128xf32>
    %150 = arith.addf %147, %149 : vector<8x128xf32>
    %c0_52 = arith.constant 0 : index
    %c0_53 = arith.constant 0 : index
    %151 = vector.load %arg4[%c0_52, %c0_53] : memref<8x4xf32, #tpu.memory_space<vmem>>, vector<8x4xf32>
    %cst_54 = arith.constant dense<0.000000e+00> : vector<8x128xf32>
    %152 = tpu.matmul %151, %10, %cst_54 {dimension_numbers = #tpu.dot_dimension_numbers<[1], [0], [0], [1], [0, 0, 1, 1], [], []>} : vector<8x4xf32>, vector<4x128xf32>, vector<8x128xf32> -> vector<8x128xf32>
    %153 = vector.extract_strided_slice %56 {offsets = [0, 2], sizes = [8, 1], strides = [1, 1]} : vector<8x3xf32> to vector<8x1xf32>
    %154 = vector.broadcast %153 : vector<8x1xf32> to vector<8x128xf32>
    %155 = arith.addf %152, %154 : vector<8x128xf32>
    %156 = arith.addf %150, %155 : vector<8x128xf32>
    %cst_55 = arith.constant 0.000000e+00 : f32
    %157 = vector.broadcast %cst_55 : f32 to vector<8x128xf32>
    %158 = arith.maximumf %156, %157 : vector<8x128xf32>
    %c0_56 = arith.constant 0 : index
    %c0_57 = arith.constant 0 : index
    %159 = vector.load %arg6[%c0_56, %c0_57] : memref<8x128xf32, #tpu.memory_space<vmem>>, vector<8x128xf32>
    tpu.vector_store %arg6[%c0_56, %c0_57], %158 {strides = array<i32>} : memref<8x128xf32, #tpu.memory_space<vmem>>, vector<8x128xf32>,
    return
  }
  func.func @transform_0(%arg0: i32) -> (i32, i32, i32) {
    %c0_i32 = arith.constant 0 : i32
    %c0_i32_0 = arith.constant 0 : i32
    %c0_i32_1 = arith.constant 0 : i32
    return %c0_i32, %c0_i32_0, %arg0 : i32, i32, i32
  }
  func.func @transform_1(%arg0: i32) -> (i32, i32) {
    %c0_i32 = arith.constant 0 : i32
    %c0_i32_0 = arith.constant 0 : i32
    %c0_i32_1 = arith.constant 0 : i32
    return %c0_i32, %c0_i32_0 : i32, i32
  }
  func.func @transform_2(%arg0: i32) -> (i32, i32) {
    %c0_i32 = arith.constant 0 : i32
    %c0_i32_0 = arith.constant 0 : i32
    %c0_i32_1 = arith.constant 0 : i32
    return %c0_i32, %c0_i32_0 : i32, i32
  }
  func.func @transform_3(%arg0: i32) -> (i32, i32) {
    %c0_i32 = arith.constant 0 : i32
    %c0_i32_0 = arith.constant 0 : i32
    %c0_i32_1 = arith.constant 0 : i32
    return %c0_i32, %c0_i32_0 : i32, i32
  }
  func.func @transform_4(%arg0: i32) -> (i32, i32) {
    %c0_i32 = arith.constant 0 : i32
    %c0_i32_0 = arith.constant 0 : i32
    %c0_i32_1 = arith.constant 0 : i32
    return %c0_i32, %c0_i32_0 : i32, i32
  }
  func.func @transform_5(%arg0: i32) -> (i32, i32) {
    %c0_i32 = arith.constant 0 : i32
    %c0_i32_0 = arith.constant 0 : i32
    return %c0_i32, %arg0 : i32, i32
  }
}

</mosaic_0001>

<llo_original>
// kernel: tpu_custom_call.1
$region0: #{tpu_custom_call.1}
  #allocation0 [shape = 'u32[]', space=smem, size = 0x4, offset = 0x4, fixed_abs, tag = 'smem constant byte address 0x4 - core index']
  #allocation1 [shape = 'u32[144,128]{1,0:T(1,128)}', space=vmem, size = 0x12000, scoped, tag = 'internal scratch']
  %s0 = inlined_call_operand.vmem [shape: f32[4,4,128], index: 0, kind: input, shape index: {}]
  %s1 = inlined_call_operand.vmem [shape: f32[8,36], index: 1, kind: input, shape index: {}]
  %s2 = inlined_call_operand.hbm [shape: f32[8,72], index: 2, kind: input, shape index: {}]
  %s3 = inlined_call_operand.vmem [shape: f32[8,4], index: 3, kind: input, shape index: {}]
  %s4 = inlined_call_operand.vmem [shape: f32[8,3], index: 4, kind: input, shape index: {}]
  %s5 = inlined_call_operand.hbm [shape: f32[8,128], index: 5, kind: output, shape index: {}]
  %s6 = sld [smem:[#allocation0]]
  $region34: #{tpu_custom_call.1} parent=0
    _
  %s8 = ssub.s32 1, %s6
  %s9 = scalar_select 0, %s8, %s6
  $region1: #{tpu_custom_call.1} parent=0
    #allocation2 [shape = 'u8[4096]{0}', space=vmem, size = 0x1000, scoped, tag = 'input window, operand 2, single buffered']
    #allocation3 [shape = 's32[1]{0}', space=sflag, size = 0x4, scoped, tag = 'scoped memory for tpu_custom_call.1']
    #allocation4 [shape = 's32[1]{0}', space=sflag, size = 0x4, scoped, tag = 'scoped memory for tpu_custom_call.1']
    #allocation5 [shape = 'u8[4096]{0}', space=vmem, size = 0x1000, scoped, tag = 'output window, operand 0, single buffered']
    %10 = vsyncpa [#allocation3], 0
    %11 = vsyncpa [#allocation4], 0
    // Predicated region
    $region2: #{tpu_custom_call.1} parent=1 // pred_check
      _
    $region3: #{tpu_custom_call.1} parent=1 // pred_check_branch
      %13 = sbr.rel (0) target = $region5
    $region4: #{tpu_custom_call.1} parent=1 // pred_region
      _
    $region5: #{tpu_custom_call.1} parent=1 // pred_fallthru
      _
    // Predicated region
    $region6: #{tpu_custom_call.1} parent=1 // pred_check
      _
    $region7: #{tpu_custom_call.1} parent=1 // pred_check_branch
      %15 = sbr.rel (0) target = $region9
    $region8: #{tpu_custom_call.1} parent=1 // pred_region
      _
    $region9: #{tpu_custom_call.1} parent=1 // pred_fallthru
      _
    // Predicated region
    $region10: #{tpu_custom_call.1} parent=1 // pred_check
      _
    $region11: #{tpu_custom_call.1} parent=1 // pred_check_branch
      %17 = sbr.rel (0) target = $region13
    $region12: #{tpu_custom_call.1} parent=1 // pred_region
      %s19 = ssub.s32 128, 128
      %20 = vsyncadd [#allocation3], %s19
      %s22 = sshll.u32 [#allocation2], 4
      %s23 = int_to_ptr.vmem [resolvable:$true] %s22
      %25 = dma.hbm_to_vmem [thread:$0]  %s2, 128, %s23, [#allocation3]
    $region13: #{tpu_custom_call.1} parent=1 // pred_fallthru
      _
    // Predicated region
    $region14: #{tpu_custom_call.1} parent=1 // pred_check
      _
    $region15: #{tpu_custom_call.1} parent=1 // pred_check_branch
      %27 = sbr.rel (0) target = $region17
    $region16: #{tpu_custom_call.1} parent=1 // pred_region
      _
    $region17: #{tpu_custom_call.1} parent=1 // pred_fallthru
      _
    // Predicated region
    $region18: #{tpu_custom_call.1} parent=1 // pred_check
      _
    $region19: #{tpu_custom_call.1} parent=1 // pred_check_branch
      %29 = sbr.rel (0) target = $region21
    $region20: #{tpu_custom_call.1} parent=1 // pred_region
      _
    $region21: #{tpu_custom_call.1} parent=1 // pred_fallthru
      _
    // Predicated region
    $region22: #{tpu_custom_call.1} parent=1 // pred_check
      _
    $region23: #{tpu_custom_call.1} parent=1 // pred_check_branch
      %31 = sbr.rel (0) target = $region25
    $region24: #{tpu_custom_call.1} parent=1 // pred_region
      %32 = dma.done [#allocation3], 128
    $region25: #{tpu_custom_call.1} parent=1 // pred_fallthru
      _
    %v33 = vld [vmem:[%s0] sm:$0xf]
    %s34 = scalar_lea.vmem %s0, 4
    %v35 = vld [vmem:[%s34] sm:$0xf]
    %v36 = vmax.f32 %v33, %v35
    %s37 = scalar_lea.vmem %s0, 8
    %v38 = vld [vmem:[%s37] sm:$0xf]
    %s39 = scalar_lea.vmem %s0, 12
    %v40 = vld [vmem:[%s39] sm:$0xf]
    %v41 = vmax.f32 %v38, %v40
    %v42 = vmax.f32 %v36, %v41
    %v43 = vlaneseq
    %v44 = vand.u32 %v43, 127
    %vm45 = vcmp.lt.s32.totalorder %v44, 0
    %v46 = vsub.s32 0, %v44
    %v47 = vsel %vm45, %v46, %v44
    %v48 = vshrl.u32 %v47, 3
    %v49 = vand.u32 %v47, 7
    %v50 = vsub.s32 0, %v49
    %v51 = vsel %vm45, %v50, %v49
    %vm52 = vcmp.ne.s32.totalorder %v51, 0
    %vm53 = vcmp.lt.s32.totalorder %v51, 0
    %vm54 = vmand %vm53, %vm52
    %v55 = vadd.s32 %v51, 8
    %v56 = vsel %vm54, %v55, %v51
    %vm57 = vcmp.lt.s32.totalorder %v44, 0
    %v58 = vsub.s32 0, %v44
    %v59 = vsel %vm57, %v58, %v44
    %v60 = vshrl.u32 %v59, 6
    %v61 = vand.u32 %v59, 63
    %v62 = vsub.s32 0, %v61
    %v63 = vsel %vm57, %v62, %v61
    %vm64 = vcmp.ne.s32.totalorder %v63, 0
    %vm65 = vcmp.lt.s32.totalorder %v63, 0
    %vm66 = vmand %vm65, %vm64
    %v67 = vadd.s32 %v63, 64
    %v68 = vsel %vm66, %v67, %v63
    %vm69 = vcmp.ge.s32.totalorder %v56, 1
    %vm70 = vcmp.le.s32.totalorder %v56, 6
    %vm71 = vcmp.ge.s32.totalorder %v68, 8
    %vm72 = vcmp.lt.s32.totalorder %v68, 56
    %vm73 = vmand %vm71, %vm69
    %vm74 = vmand %vm71, %vm70
    %vm75 = vmand %vm72, %vm69
    %vm76 = vmand %vm72, %vm70
    %v77 = vld [vmem:[%s4] sm:$0xff]
    %v78 = vld [vmem:[%s1] sm:$0xff]
    %79 = vrot.lane.b32.xlu0 %v42, 9
    %v80 = vpop.permute.xlu0 %79
    %v81 = vsel %vm73, 1, 0
    %vm82 = vcmp.eq.s32.totalorder %v81, 1
    %v83 = vsel %vm82, %v80, 0.0
    %84 = vrot.lane.b32.xlu0 %v42, 8
    %v85 = vpop.permute.xlu0 %84
    %v86 = vsel %vm71, 1, 0
    %vm87 = vcmp.eq.s32.totalorder %v86, 1
    %v88 = vsel %vm87, %v85, 0.0
    %89 = vrot.lane.b32.xlu0 %v42, 7
    %v90 = vpop.permute.xlu0 %89
    %v91 = vsel %vm74, 1, 0
    %vm92 = vcmp.eq.s32.totalorder %v91, 1
    %v93 = vsel %vm92, %v90, 0.0
    %94 = vrot.lane.b32.xlu0 %v42, 1
    %v95 = vpop.permute.xlu0 %94
    %v96 = vsel %vm69, 1, 0
    %vm97 = vcmp.eq.s32.totalorder %v96, 1
    %v98 = vsel %vm97, %v95, 0.0
    %99 = vrot.lane.b32.xlu0 %v42, 127
    %v100 = vpop.permute.xlu0 %99
    %v101 = vsel %vm70, 1, 0
    %vm102 = vcmp.eq.s32.totalorder %v101, 1
    %v103 = vsel %vm102, %v100, 0.0
    %104 = vrot.lane.b32.xlu0 %v42, 121
    %v105 = vpop.permute.xlu0 %104
    %v106 = vsel %vm75, 1, 0
    %vm107 = vcmp.eq.s32.totalorder %v106, 1
    %v108 = vsel %vm107, %v105, 0.0
    %109 = vrot.lane.b32.xlu0 %v42, 120
    %v110 = vpop.permute.xlu0 %109
    %v111 = vsel %vm72, 1, 0
    %vm112 = vcmp.eq.s32.totalorder %v111, 1
    %v113 = vsel %vm112, %v110, 0.0
    %114 = vrot.lane.b32.xlu0 %v42, 119
    %v115 = vpop.permute.xlu0 %114
    %v116 = vsel %vm76, 1, 0
    %vm117 = vcmp.eq.s32.totalorder %v116, 1
    %v118 = vsel %vm117, %v115, 0.0
    %v120 = vrot.slane %v88, 4
    %v123 = vrot.slane %v98, 4
    %v126 = vrot.slane %v103, 4
    %v129 = vrot.slane %v113, 4
    %vm131 = vcmask 1043456
    %v132 = vsel %vm131, %v83, %v120
    %v133 = vsel %vm131, %v93, %v123
    %v134 = vsel %vm131, %v42, %v126
    %v135 = vsel %vm131, %v108, %v129
    %137 = vset.pattern.permute.xlu0 0
    %138 = vperm.xlu0 %137, %v77
    %v139 = vpop.permute.xlu0 %138
    %vm141 = vcmask 293888
    %v143 = vsel %vm141, %v78, 0
    %v146 = vsel %vm131, %v118, 0
    %148 = vmatprep.subr.mxu0 0.0
    %149 = vmatpush1.msra.mxu0 %v132
    %150 = vmatprep.subr.mxu0 0.0
    %151 = vmatpush1.msra.mxu0 %v133
    %152 = vmatprep.subr.mxu0 0.0
    %153 = vmatpush1.msra.mxu0 %v134
    %154 = vmatprep.subr.mxu0 0.0
    %155 = vmatpush1.msra.mxu0 %v135
    %156 = vmatprep.subr.mxu0 0.0
    %157 = vmatpush1.msra.mxu0 %v146
    %158 = vmatprep.subr.mxu0 0.0
    %159 = vmatpush1.msra.mxu0 0.0
    %160 = vmatprep.subr.mxu0 0.0
    %161 = vmatpush1.msra.mxu0 0.0
    %162 = vmatprep.subr.mxu0 0.0
    %163 = vmatpush1.msra.mxu0 0.0
    %164 = vmatprep.subr.mxu0 0.0
    %165 = vmatpush1.msra.mxu0 0.0
    %166 = vmatprep.subr.mxu0 0.0
    %167 = vmatpush1.msra.mxu0 0.0
    %168 = vmatprep.subr.mxu0 0.0
    %169 = vmatpush1.msra.mxu0 0.0
    %170 = vmatprep.subr.mxu0 0.0
    %171 = vmatpush1.msra.mxu0 0.0
    %172 = vmatprep.subr.mxu0 0.0
    %173 = vmatpush1.msra.mxu0 0.0
    %174 = vmatprep.subr.mxu0 0.0
    %175 = vmatpush1.msra.mxu0 0.0
    %176 = vmatprep.subr.mxu0 0.0
    %177 = vmatpush1.msra.mxu0 0.0
    %178 = vmatprep.subr.mxu0 0.0
    %179 = vmatpush1.msra.mxu0 0.0
    %180 = vmatprep.subr.mxu0 0.0
    %181 = vmatpush1.msra.mxu0 0.0
    %182 = vmatprep.subr.mxu0 0.0
    %183 = vmatpush1.msra.mxu0 0.0
    %184 = vmatprep.subr.mxu0 0.0
    %185 = vmatpush1.msra.mxu0 0.0
    %186 = vmatprep.subr.mxu0 0.0
    %187 = vmatpush1.msra.mxu0 0.0
    %188 = vmatprep.subr.mxu0 0.0
    %189 = vmatpush1.msra.mxu0 0.0
    %190 = vmatprep.subr.mxu0 0.0
    %191 = vmatpush1.msra.mxu0 0.0
    %192 = vmatprep.subr.mxu0 0.0
    %193 = vmatpush1.msra.mxu0 0.0
    %194 = vmatprep.subr.mxu0 0.0
    %195 = vmatpush1.msra.mxu0 0.0
    %196 = vmatprep.subr.mxu0 0.0
    %197 = vmatpush1.msra.mxu0 0.0
    %198 = vmatprep.subr.mxu0 0.0
    %199 = vmatpush1.msra.mxu0 0.0
    %200 = vmatprep.subr.mxu0 0.0
    %201 = vmatpush1.msra.mxu0 0.0
    %202 = vmatprep.subr.mxu0 0.0
    %203 = vmatpush1.msra.mxu0 0.0
    %204 = vmatprep.subr.mxu0 0.0
    %205 = vmatpush1.msra.mxu0 0.0
    %206 = vmatprep.subr.mxu0 0.0
    %207 = vmatpush1.msra.mxu0 0.0
    %208 = vmatprep.subr.mxu0 0.0
    %209 = vmatpush1.msra.mxu0 0.0
    %210 = vmatprep.subr.mxu0 0.0
    %211 = vmatpush1.msra.mxu0 0.0
    %212 = vmatprep.mubr.f32.mxu0 0.0
    %213 = vmatmul.mubr.f32.gmra.mrb[0].mxu0 %v143
    %v214 = vpop.f32.mrb[0].mxu0
    %v215 = vadd.f32 %v139, %v214
    %v216 = vpop.f32.mrb[0].mxu0
    %217 = vdwg.mxu0
    %v218 = vmax.f32 %v215, 0.0
    %v219 = vld [vmem:[#allocation2] sm:$0xff]
    %220 = vrot.lane.b32.xlu0 %v218, 9
    %v221 = vpop.permute.xlu0 %220
    %v222 = vsel %vm82, %v221, 0.0
    %223 = vrot.lane.b32.xlu0 %v218, 8
    %v224 = vpop.permute.xlu0 %223
    %v225 = vsel %vm87, %v224, 0.0
    %226 = vrot.lane.b32.xlu0 %v218, 7
    %v227 = vpop.permute.xlu0 %226
    %v228 = vsel %vm92, %v227, 0.0
    %229 = vrot.lane.b32.xlu0 %v218, 1
    %v230 = vpop.permute.xlu0 %229
    %v231 = vsel %vm97, %v230, 0.0
    %232 = vrot.lane.b32.xlu0 %v218, 127
    %v233 = vpop.permute.xlu0 %232
    %v234 = vsel %vm102, %v233, 0.0
    %235 = vrot.lane.b32.xlu0 %v218, 121
    %v236 = vpop.permute.xlu0 %235
    %v237 = vsel %vm107, %v236, 0.0
    %238 = vrot.lane.b32.xlu0 %v218, 120
    %v239 = vpop.permute.xlu0 %238
    %v240 = vsel %vm112, %v239, 0.0
    %241 = vrot.lane.b32.xlu0 %v218, 119
    %v242 = vpop.permute.xlu0 %241
    %v243 = vsel %vm117, %v242, 0.0
    %244 = vset.pattern.permute.xlu0 1
    %245 = vperm.xlu0 %244, %v77
    %v246 = vpop.permute.xlu0 %245
    %vm248 = vcmask 588800
    %v250 = vsel %vm248, %v219, 0
    %252 = vmatprep.subr.mxu0 0.0
    %253 = vmatpush1.msra.mxu0 %v222
    %254 = vmatprep.subr.mxu0 0.0
    %255 = vmatpush1.msra.mxu0 %v225
    %256 = vmatprep.subr.mxu0 0.0
    %257 = vmatpush1.msra.mxu0 %v228
    %258 = vmatprep.subr.mxu0 0.0
    %259 = vmatpush1.msra.mxu0 %v231
    %260 = vmatprep.subr.mxu0 0.0
    %261 = vmatpush1.msra.mxu0 %v218
    %262 = vmatprep.subr.mxu0 0.0
    %263 = vmatpush1.msra.mxu0 %v234
    %264 = vmatprep.subr.mxu0 0.0
    %265 = vmatpush1.msra.mxu0 %v237
    %266 = vmatprep.subr.mxu0 0.0
    %267 = vmatpush1.msra.mxu0 %v240
    %268 = vmatprep.subr.mxu0 0.0
    %269 = vmatpush1.msra.mxu0 %v243
    %270 = vmatprep.subr.mxu0 0.0
    %271 = vmatpush1.msra.mxu0 0.0
    %272 = vmatprep.subr.mxu0 0.0
    %273 = vmatpush1.msra.mxu0 0.0
    %274 = vmatprep.subr.mxu0 0.0
    %275 = vmatpush1.msra.mxu0 0.0
    %276 = vmatprep.subr.mxu0 0.0
    %277 = vmatpush1.msra.mxu0 0.0
    %278 = vmatprep.subr.mxu0 0.0
    %279 = vmatpush1.msra.mxu0 0.0
    %280 = vmatprep.subr.mxu0 0.0
    %281 = vmatpush1.msra.mxu0 0.0
    %282 = vmatprep.subr.mxu0 0.0
    %283 = vmatpush1.msra.mxu0 0.0
    %284 = vmatprep.subr.mxu0 0.0
    %285 = vmatpush1.msra.mxu0 0.0
    %286 = vmatprep.subr.mxu0 0.0
    %287 = vmatpush1.msra.mxu0 0.0
    %288 = vmatprep.subr.mxu0 0.0
    %289 = vmatpush1.msra.mxu0 0.0
    %290 = vmatprep.subr.mxu0 0.0
    %291 = vmatpush1.msra.mxu0 0.0
    %292 = vmatprep.subr.mxu0 0.0
    %293 = vmatpush1.msra.mxu0 0.0
    %294 = vmatprep.subr.mxu0 0.0
    %295 = vmatpush1.msra.mxu0 0.0
    %296 = vmatprep.subr.mxu0 0.0
    %297 = vmatpush1.msra.mxu0 0.0
    %298 = vmatprep.subr.mxu0 0.0
    %299 = vmatpush1.msra.mxu0 0.0
    %300 = vmatprep.subr.mxu0 0.0
    %301 = vmatpush1.msra.mxu0 0.0
    %302 = vmatprep.subr.mxu0 0.0
    %303 = vmatpush1.msra.mxu0 0.0
    %304 = vmatprep.subr.mxu0 0.0
    %305 = vmatpush1.msra.mxu0 0.0
    %306 = vmatprep.subr.mxu0 0.0
    %307 = vmatpush1.msra.mxu0 0.0
    %308 = vmatprep.subr.mxu0 0.0
    %309 = vmatpush1.msra.mxu0 0.0
    %310 = vmatprep.subr.mxu0 0.0
    %311 = vmatpush1.msra.mxu0 0.0
    %312 = vmatprep.subr.mxu0 0.0
    %313 = vmatpush1.msra.mxu0 0.0
    %314 = vmatprep.subr.mxu0 0.0
    %315 = vmatpush1.msra.mxu0 0.0
    %316 = vmatprep.mubr.f32.mxu0 0.0
    %317 = vmatmul.mubr.f32.gmra.mrb[0].mxu0 %v250
    %v318 = vpop.f32.mrb[0].mxu0
    %v319 = vadd.f32 %v246, %v318
    %v320 = vpop.f32.mrb[0].mxu0
    %321 = vdwg.mxu0
    %v322 = vld [vmem:[%s3] sm:$0xff]
    %323 = vset.pattern.permute.xlu0 2
    %324 = vperm.xlu0 %323, %v77
    %v325 = vpop.permute.xlu0 %324
    %vm327 = vcmask 31744
    %v329 = vsel %vm327, %v322, 0
    %v332 = vsel %vm131, %v42, 0
    %334 = vmatprep.subr.mxu0 0.0
    %335 = vmatpush1.msra.mxu0 %v332
    %336 = vmatprep.subr.mxu0 0.0
    %337 = vmatpush1.msra.mxu0 0.0
    %338 = vmatprep.subr.mxu0 0.0
    %339 = vmatpush1.msra.mxu0 0.0
    %340 = vmatprep.subr.mxu0 0.0
    %341 = vmatpush1.msra.mxu0 0.0
    %342 = vmatprep.subr.mxu0 0.0
    %343 = vmatpush1.msra.mxu0 0.0
    %344 = vmatprep.subr.mxu0 0.0
    %345 = vmatpush1.msra.mxu0 0.0
    %346 = vmatprep.subr.mxu0 0.0
    %347 = vmatpush1.msra.mxu0 0.0
    %348 = vmatprep.subr.mxu0 0.0
    %349 = vmatpush1.msra.mxu0 0.0
    %350 = vmatprep.subr.mxu0 0.0
    %351 = vmatpush1.msra.mxu0 0.0
    %352 = vmatprep.subr.mxu0 0.0
    %353 = vmatpush1.msra.mxu0 0.0
    %354 = vmatprep.subr.mxu0 0.0
    %355 = vmatpush1.msra.mxu0 0.0
    %356 = vmatprep.subr.mxu0 0.0
    %357 = vmatpush1.msra.mxu0 0.0
    %358 = vmatprep.subr.mxu0 0.0
    %359 = vmatpush1.msra.mxu0 0.0
    %360 = vmatprep.subr.mxu0 0.0
    %361 = vmatpush1.msra.mxu0 0.0
    %362 = vmatprep.subr.mxu0 0.0
    %363 = vmatpush1.msra.mxu0 0.0
    %364 = vmatprep.subr.mxu0 0.0
    %365 = vmatpush1.msra.mxu0 0.0
    %366 = vmatprep.subr.mxu0 0.0
    %367 = vmatpush1.msra.mxu0 0.0
    %368 = vmatprep.subr.mxu0 0.0
    %369 = vmatpush1.msra.mxu0 0.0
    %370 = vmatprep.subr.mxu0 0.0
    %371 = vmatpush1.msra.mxu0 0.0
    %372 = vmatprep.subr.mxu0 0.0
    %373 = vmatpush1.msra.mxu0 0.0
    %374 = vmatprep.subr.mxu0 0.0
    %375 = vmatpush1.msra.mxu0 0.0
    %376 = vmatprep.subr.mxu0 0.0
    %377 = vmatpush1.msra.mxu0 0.0
    %378 = vmatprep.subr.mxu0 0.0
    %379 = vmatpush1.msra.mxu0 0.0
    %380 = vmatprep.subr.mxu0 0.0
    %381 = vmatpush1.msra.mxu0 0.0
    %382 = vmatprep.subr.mxu0 0.0
    %383 = vmatpush1.msra.mxu0 0.0
    %384 = vmatprep.subr.mxu0 0.0
    %385 = vmatpush1.msra.mxu0 0.0
    %386 = vmatprep.subr.mxu0 0.0
    %387 = vmatpush1.msra.mxu0 0.0
    %388 = vmatprep.subr.mxu0 0.0
    %389 = vmatpush1.msra.mxu0 0.0
    %390 = vmatprep.subr.mxu0 0.0
    %391 = vmatpush1.msra.mxu0 0.0
    %392 = vmatprep.subr.mxu0 0.0
    %393 = vmatpush1.msra.mxu0 0.0
    %394 = vmatprep.subr.mxu0 0.0
    %395 = vmatpush1.msra.mxu0 0.0
    %396 = vmatprep.subr.mxu0 0.0
    %397 = vmatpush1.msra.mxu0 0.0
    %398 = vmatprep.mubr.f32.mxu0 0.0
    %399 = vmatmul.mubr.f32.gmra.mrb[0].mxu0 %v329
    %v400 = vpop.f32.mrb[0].mxu0
    %v401 = vadd.f32 %v325, %v400
    %v402 = vpop.f32.mrb[0].mxu0
    %403 = vdwg.mxu0
    %v404 = vadd.f32 %v319, %v401
    %v405 = vmax.f32 %v404, 0.0
    %406 = vst [vmem:[#allocation5] sm:$0xff] %v405
    // Predicated region
    $region26: #{tpu_custom_call.1} parent=1 // pred_check
      _
    $region27: #{tpu_custom_call.1} parent=1 // pred_check_branch
      %408 = sbr.rel (0) target = $region29
    $region28: #{tpu_custom_call.1} parent=1 // pred_region
      %s410 = ssub.s32 128, 128
      %411 = vsyncadd [#allocation4], %s410
      %s413 = sshll.u32 [#allocation5], 4
      %s414 = int_to_ptr.vmem [resolvable:$true] %s413
      %416 = dma.vmem_to_hbm [thread:$0]  %s414, 128, %s5, [#allocation4]
    $region29: #{tpu_custom_call.1} parent=1 // pred_fallthru
      _
    // Predicated region
    $region30: #{tpu_custom_call.1} parent=1 // pred_check
      _
    $region31: #{tpu_custom_call.1} parent=1 // pred_check_branch
      %418 = sbr.rel (0) target = $region33
    $region32: #{tpu_custom_call.1} parent=1 // pred_region
      %419 = dma.done [#allocation4], 128
    $region33: #{tpu_custom_call.1} parent=1 // pred_fallthru
      _
    %420 = vsyncpa [#allocation3], 1
    %421 = vsyncpa [#allocation4], 1

</llo_original>
